<compile_context>
chip_gen: v7x
topology: tpu7x:2x2x1
jax: 0.10.0
libtpu: 0.0.40
codegen_flags: <defaults>
</compile_context>

<pallas_src>
import functools

import jax
import jax.numpy as jnp
from jax.experimental import pallas as pl
from jax.experimental.pallas import tpu as pltpu


def _chanavg_kernel(*refs, kernel_size, dilation, pad, halo, use_halo):
    """Depthwise 1/K moving average over seq for one (Bt, Lt, Ht) tile.

    refs (use_halo=False): x_ref (Bt, Lt, Ht), o_ref (Bt, Lt, Ht)
    refs (use_halo=True):  x_ref, prev_ref (Bt, halo, Ht),
                           next_ref (Bt, halo, Ht), o_ref
    prev_ref / next_ref hold the `halo` input rows immediately before / after
    the current seq block (index maps clamp at the array edges; boundary
    blocks mask them to zero here so edges see zero padding).
    """
    if use_halo:
        x_ref, prev_ref, next_ref, o_ref = refs
    else:
        x_ref, o_ref = refs

    bt, lt, ht = x_ref.shape
    xf = x_ref[...].astype(jnp.float32)          # single load + cast; f32 accum.

    if pad == 0:                                 # kernel_size == 1
        acc = xf
    else:
        if use_halo:
            l_blk = pl.program_id(1)
            lo = prev_ref[...].astype(jnp.float32)
            hi = next_ref[...].astype(jnp.float32)
            # Sequence-boundary blocks see zero padding, not (clamped) halo data.
            lo = jnp.where(l_blk > 0, lo, jnp.zeros_like(lo))
            hi = jnp.where(l_blk < pl.num_programs(1) - 1, hi, jnp.zeros_like(hi))
        else:
            lo = jnp.zeros((bt, halo, ht), jnp.float32)
            hi = jnp.zeros((bt, halo, ht), jnp.float32)

        # Register-level padded window; every concat piece is sublane-aligned.
        xp = jnp.concatenate([lo, xf, hi], axis=1)   # (bt, lt + 2*halo, ht)

        acc = None
        base = halo - pad
        for k in range(kernel_size):                 # static unroll (small K)
            s = base + k * dilation
            tap = xf if s == halo else xp[:, s:s + lt, :]   # reuse cast center tap
            acc = tap if acc is None else acc + tap
        # TODO(synk): for large K (>~8) a cumsum-difference formulation keeps
        # per-element work O(1); the static unroll is the right call for K<=5.

    o_ref[...] = (acc * (1.0 / kernel_size)).astype(o_ref.dtype)


def _vmem_capacity_bytes():
    """Per-core VMEM capacity; conservative fallback if the query fails."""
    try:
        info = pltpu.get_tpu_info()
        cap = getattr(info, "vmem_capacity_bytes", None)
        if cap:
            return int(cap)
    except Exception:
        pass
    return 64 << 20    # v7x per-TensorCore VMEM (smallest across v5e/v6e/v7x)


def _divisors_desc(n):
    out = set()
    i = 1
    while i * i <= n:
        if n % i == 0:
            out.add(i)
            out.add(n // i)
        i += 1
    return sorted(out, reverse=True)


def _select_tiling(B, L, H, itemsize, pad, vmem_capacity):
    """Pick (Bt, Lt, Ht, halo, use_halo) for the (B, L, H) problem."""
    # Sub-32-bit dtypes pack along sublanes: keep seq blocks aligned to the
    # packed sublane tile so all BlockSpec shapes stay (8*pack, 128)-friendly.
    pack = max(1, 4 // max(1, itemsize))
    seq_align = 8 * pack
    halo = seq_align * (-(-pad // seq_align)) if pad > 0 else 0

    # Budget: double-buffered (in + out) blocks in the input dtype plus a few
    # f32-sized in-register/VMEM temporaries per block.
    total_budget = min(vmem_capacity // 2, 28 << 20)
    overhead = 4 + 4 * pack
    block_budget = max(total_budget // overhead, seq_align * 128 * itemsize)

    # Hidden-dim candidates: prefer the FULL H (fully contiguous HBM rows).
    if H % 128 == 0:
        ht_cands = [H] + [c for c in (2048, 1024, 512, 256, 128)
                          if c < H and H % c == 0]
    else:
        # TODO(synk): lane-packing layout for H not a multiple of 128; the
        # full-H block below is correct but lane-sparse (masked stores).
        ht_cands = [H]

    # Seq-dim candidates: full L first, then halo-aligned divisors of L.
    lt_cands = [L]
    if pad > 0 and L % halo == 0:
        lt_cands += [halo * d for d in _divisors_desc(L // halo) if halo * d < L]

    b_cands = _divisors_desc(B)

    def blk(bt_, lt_, ht_):
        return bt_ * lt_ * ht_ * itemsize

    chosen = None
    for ht in ht_cands:
        for lt in lt_cands:
            if blk(1, lt, ht) <= block_budget:
                bt = next(d for d in b_cands if blk(d, lt, ht) <= block_budget)
                chosen = [bt, lt, ht]
                break
        if chosen is not None:
            break
    if chosen is None:
        # TODO(synk): extreme shapes (e.g. huge H not divisible by 128 at huge
        # L) exceed even the minimal tile; take it and stretch vmem_limit.
        chosen = [1, lt_cands[-1], ht_cands[-1]]
    bt, lt, ht = chosen

    # Keep enough grid steps for the double-buffered pipeline and for v7x's
    # two TensorCores; shrink batch first, then seq, then (last) hidden.
    min_steps = 8

    def steps(bt_, lt_, ht_):
        return (B // bt_) * (L // lt_) * (H // ht_)

    while steps(bt, lt, ht) < min_steps:
        smaller_b = [d for d in b_cands if d < bt]
        if smaller_b:
            bt = smaller_b[0]
            continue
        smaller_l = [c for c in lt_cands if c < lt]
        if smaller_l:
            lt = smaller_l[0]
            continue
        smaller_h = [c for c in ht_cands if c < ht]
        if smaller_h:
            ht = smaller_h[0]
            continue
        break

    use_halo = pad > 0 and (L // lt) > 1
    return bt, lt, ht, halo, use_halo


def channel_wise_average_conv1d(x, *, kernel_size=3, dilation=1):
    """x: (B, L, H) float array -> (B, L, H) depthwise 1/K moving average."""
    if x.ndim != 3:
        raise ValueError(f"expected (batch, seq, hidden), got shape {x.shape}")
    B, L, H = x.shape
    pad = kernel_size // 2
    out_len = L + 2 * pad - dilation * (kernel_size - 1)
    if out_len != L:
        raise ValueError(
            "Only 'same-length' configs are supported; "
            f"kernel_size={kernel_size}, dilation={dilation} maps L={L} -> {out_len}.")

    itemsize = jnp.dtype(x.dtype).itemsize
    phys_vmem = _vmem_capacity_bytes()
    Bt, Lt, Ht, halo, use_halo = _select_tiling(B, L, H, itemsize, pad, phys_vmem)
    grid = (B // Bt, L // Lt, H // Ht)

    kernel = functools.partial(
        _chanavg_kernel, kernel_size=kernel_size, dilation=dilation,
        pad=pad, halo=halo, use_halo=use_halo)

    in_specs = [pl.BlockSpec((Bt, Lt, Ht), lambda b, l, h: (b, l, h))]
    operands = [x]
    if use_halo:
        halo_blocks_per_seq_block = Lt // halo        # Lt is a multiple of halo
        num_halo_blocks = L // halo

        def prev_map(b, l, h):
            return (b, jnp.maximum(l * halo_blocks_per_seq_block - 1, 0), h)

        def next_map(b, l, h):
            return (b, jnp.minimum((l + 1) * halo_blocks_per_seq_block,
                                   num_halo_blocks - 1), h)

        in_specs += [pl.BlockSpec((Bt, halo, Ht), prev_map),
                     pl.BlockSpec((Bt, halo, Ht), next_map)]
        operands += [x, x]

    # Scoped-VMEM limit from the actual footprint (double-buffered in/out +
    # halo buffers + f32 temporaries), capped at physical VMEM (v5e's 16 MiB
    # default scoped limit is too small for large blocks otherwise).
    blk_bytes = Bt * Lt * Ht * itemsize
    halo_bytes = 2 * Bt * halo * Ht * itemsize if use_halo else 0
    f32_tmp = Bt * (Lt + 2 * halo) * Ht * 4
    live = 2 * (2 * blk_bytes + halo_bytes) + 4 * f32_tmp
    vmem_limit = int(min(phys_vmem, max(32 << 20, live + (8 << 20))))

    return pl.pallas_call(
        kernel,
        out_shape=jax.ShapeDtypeStruct((B, L, H), x.dtype),
        grid_spec=pltpu.PrefetchScalarGridSpec(
            num_scalar_prefetch=0,
            grid=grid,
            in_specs=in_specs,
            out_specs=pl.BlockSpec((Bt, Lt, Ht), lambda b, l, h: (b, l, h)),
        ),
        compiler_params=pltpu.CompilerParams(
            dimension_semantics=("parallel", "parallel", "parallel"),
            vmem_limit_bytes=vmem_limit),
    )(*operands)


def _reference(x, kernel_size=3, dilation=1):
    pad = kernel_size // 2
    L = x.shape[1]
    xp = jnp.pad(x.astype(jnp.float32), ((0, 0), (pad, pad), (0, 0)))
    taps = [xp[:, k * dilation:k * dilation + L] for k in range(kernel_size)]
    return (sum(taps) * (1.0 / kernel_size)).astype(x.dtype)


if __name__ == "__main__":
    key = jax.random.PRNGKey(0)
    k1, k2, k3, k4 = jax.random.split(key, 4)

    # 1) Small shape consistent with the module (batch=2, seq=8, hidden=32).
    x1 = jax.random.normal(k1, (2, 8, 32), dtype=jnp.float32)
    o1 = jax.block_until_ready(channel_wise_average_conv1d(x1, kernel_size=3))
    assert o1.shape == x1.shape
    assert jnp.allclose(o1, _reference(x1, 3), atol=1e-5, rtol=1e-5)

    # 2) Lane-dense hidden dim; min-grid-steps logic exercises the halo path.
    x2 = jax.random.normal(k2, (3, 16, 1024), dtype=jnp.float32)
    o2 = jax.block_until_ready(channel_wise_average_conv1d(x2, kernel_size=3))
    assert jnp.allclose(o2, _reference(x2, 3), atol=1e-5, rtol=1e-5)

    # 3) bf16 input: packed-sublane alignment + sequence-tiled halo path.
    x3 = jax.random.normal(k3, (2, 64, 256), dtype=jnp.bfloat16)
    o3 = jax.block_until_ready(channel_wise_average_conv1d(x3, kernel_size=3))
    assert jnp.allclose(o3.astype(jnp.float32),
                        _reference(x3, 3).astype(jnp.float32),
                        atol=1e-2, rtol=1e-2)

    # 4) Wider stencil (kernel_size=5 -> pad=2) on the halo path.
    x4 = jax.random.normal(k4, (2, 32, 128), dtype=jnp.float32)
    o4 = jax.block_until_ready(channel_wise_average_conv1d(x4, kernel_size=5))
    assert jnp.allclose(o4, _reference(x4, 5), atol=1e-5, rtol=1e-5)

    print("KERNEL_OK")
</pallas_src>

<mosaic_0001>
module attributes {stable_mosaic.version = 11 : i64} {
  func.func @_chanavg_kernel(%arg0: i32, %arg1: i32, %arg2: i32, %arg3: memref<1x8x32xf32, #tpu.memory_space<vmem>>, %arg4: memref<1x8x32xf32, #tpu.memory_space<vmem>>) attributes {dimension_semantics = [#tpu.dimension_semantics<parallel>, #tpu.dimension_semantics<parallel>, #tpu.dimension_semantics<parallel>], iteration_bounds = array<i64: 2, 1, 1>, scalar_prefetch = 0 : i64, scratch_operands = 0 : i64, tpu.core_type = #tpu.core_type<tc>, window_params = [{transform_indices = @transform_0, window_bounds = array<i64: 1, 8, 32>}, {transform_indices = @transform_1, window_bounds = array<i64: 1, 8, 32>}]} {
    %c0 = arith.constant 0 : index
    %c0_0 = arith.constant 0 : index
    %c0_1 = arith.constant 0 : index
    %0 = vector.load %arg3[%c0, %c0_0, %c0_1] : memref<1x8x32xf32, #tpu.memory_space<vmem>>, vector<1x8x32xf32>
    %cst = arith.constant 0.000000e+00 : f32
    %1 = vector.broadcast %cst : f32 to vector<1x8x32xf32>
    %cst_2 = arith.constant 0.000000e+00 : f32
    %2 = vector.broadcast %cst_2 : f32 to vector<1x8x32xf32>
    %3 = tpu.concatenate %1, %0, %2 in 1 : vector<1x8x32xf32>, vector<1x8x32xf32>, vector<1x8x32xf32> -> vector<1x24x32xf32>
    %4 = vector.extract_strided_slice %3 {offsets = [0, 7, 0], sizes = [1, 8, 32], strides = [1, 1, 1]} : vector<1x24x32xf32> to vector<1x8x32xf32>
    %5 = arith.addf %4, %0 : vector<1x8x32xf32>
    %6 = vector.extract_strided_slice %3 {offsets = [0, 9, 0], sizes = [1, 8, 32], strides = [1, 1, 1]} : vector<1x24x32xf32> to vector<1x8x32xf32>
    %7 = arith.addf %5, %6 : vector<1x8x32xf32>
    %cst_3 = arith.constant 0.333333343 : f32
    %8 = vector.broadcast %cst_3 : f32 to vector<1x8x32xf32>
    %9 = arith.mulf %7, %8 : vector<1x8x32xf32>
    %c0_4 = arith.constant 0 : index
    %c0_5 = arith.constant 0 : index
    %c0_6 = arith.constant 0 : index
    %10 = vector.load %arg4[%c0_4, %c0_5, %c0_6] : memref<1x8x32xf32, #tpu.memory_space<vmem>>, vector<1x8x32xf32>
    tpu.vector_store %arg4[%c0_4, %c0_5, %c0_6], %9 {strides = array<i32>} : memref<1x8x32xf32, #tpu.memory_space<vmem>>, vector<1x8x32xf32>,
    return
  }
  func.func @transform_0(%arg0: i32, %arg1: i32, %arg2: i32) -> (i32, i32, i32) {
    %c0_i32 = arith.constant 0 : i32
    return %arg0, %arg1, %arg2 : i32, i32, i32
  }
  func.func @transform_1(%arg0: i32, %arg1: i32, %arg2: i32) -> (i32, i32, i32) {
    %c0_i32 = arith.constant 0 : i32
    return %arg0, %arg1, %arg2 : i32, i32, i32
  }
}

</mosaic_0001>

<llo_original>
// kernel: tpu_custom_call.1
$region0: #{tpu_custom_call.1}
  #allocation0 [shape = 'u32[]', space=smem, size = 0x4, offset = 0x4, fixed_abs, tag = 'smem constant byte address 0x4 - core index']
  #allocation1 [shape = 'u32[144,128]{1,0:T(1,128)}', space=vmem, size = 0x12000, scoped, tag = 'internal scratch']
  %s0 = inlined_call_operand.hbm [shape: f32[2,8,32], index: 0, kind: input, shape index: {}]
  %s1 = inlined_call_operand.hbm [shape: f32[2,8,32], index: 1, kind: output, shape index: {}]
  %s2 = sld [smem:[#allocation0]]
  $region41: #{tpu_custom_call.1} parent=0
    _
  %s4 = ssub.s32 1, %s2
  %s5 = scalar_select 0, %s4, %s2
  $region1: #{tpu_custom_call.1} parent=0
    #allocation2 [shape = 'u8[8192]{0}', space=vmem, size = 0x2000, scoped, tag = 'input window, operand 0']
    #allocation3 [shape = 's32[2]{0}', space=sflag, size = 0x8, scoped, tag = 'scoped memory for tpu_custom_call.1']
    #allocation4 [shape = 's32[2]{0}', space=sflag, size = 0x8, scoped, tag = 'scoped memory for tpu_custom_call.1']
    #allocation5 [shape = 'u8[8192]{0}', space=vmem, size = 0x2000, scoped, tag = 'output window, operand 0']
    %6 = vsyncpa [#allocation3], 0
    %s7 = scalar_lea.sflag [#allocation3], 1
    %8 = vsyncpa %s7, 0
    %9 = vsyncpa [#allocation4], 0
    %s10 = scalar_lea.sflag [#allocation4], 1
    %11 = vsyncpa %s10, 0
    loop: start=0, step=1, limit=4
    $region2: #{tpu_custom_call.1} parent=1 // loop_pre_header
      _
    $region3: #{tpu_custom_call.1} parent=1 // loop_header
      %s13 = sphi 0, %s17
      %p14 = scmp.ge.s32.totalorder %s13, 4
      %s20 = sphi 0, %s39
      %s21 = sphi 0, %s35
      %s22 = sphi 0, %s31
      %s23 = sphi 0, %s20
      %s24 = sphi 0, %s21
      %s25 = sphi 0, %s22
      %s26 = sphi 0, %s23
      %s27 = sphi 0, %s24
      %s28 = sphi 0, %s25
      %s46 = sphi 0, %s48
      %s49 = sphi 0, %s46
      %s50 = sphi 0, %s49
      %s66 = sphi 0, %s50
      %s76 = sphi 0, %s78
      %s79 = sphi 0, %s76
      %s80 = sphi 0, %s79
      %s96 = sphi 0, %s80
    $region4: #{tpu_custom_call.1} parent=1 // loop_header_branch
      %16 = sbr.rel (%p14) target = $region8
    $region5: #{tpu_custom_call.1} parent=1 // loop_body
      %s18 = ssub.s32 %s13, 1
      %s19 = ssub.s32 %s13, 2
      %s29 = sadd.s32 1, %s22
      %p30 = scmp.ge.s32.totalorder %s29, 1
      %s31 = scalar_select %p30, 0, %s29
      %s32 = sadd.s32 1, %s21
      %s33 = scalar_select %p30, %s32, %s21
      %p34 = scmp.ge.s32.totalorder %s33, 1
      %s35 = scalar_select %p34, 0, %s33
      %s36 = sadd.s32 1, %s20
      %s37 = scalar_select %p34, %s36, %s20
      %p38 = scmp.ge.s32.totalorder %s37, 2
      %s39 = scalar_select %p38, 0, %s37
      %s40 = ssub.s32 %s20, %s39
      %s41 = ssub.s32 %s21, %s35
      %s42 = sor.u32 %s40, %s41
      %s43 = ssub.s32 %s22, %s31
      %s44 = sor.u32 %s42, %s43
      %p45 = scmp.eq.s32.totalorder %s44, 0
      %s47 = sadd.s32 %s46, 1
      %s48 = scalar_select %p45, %s46, %s47
      %p51 = pneg %p45
      %p52 = scmp.eq.s32.totalorder %s13, 1
      %p53 = por %p51, %p52
      %p54 = scmp.ne.s32.totalorder %s46, %s49
      %p55 = scmp.eq.s32.totalorder %s13, 0
      %p56 = por %p54, %p55
      %p57 = scmp.ne.s32.totalorder %s46, %s49
      %p58 = scmp.eq.s32.totalorder %s18, 1
      %p59 = por %p57, %p58
      %p60 = scmp.ne.s32.totalorder %s49, %s50
      %p61 = scmp.eq.s32.totalorder %s18, 0
      %p62 = por %p60, %p61
      %p63 = scmp.ne.s32.totalorder %s49, %s50
      %p64 = scmp.eq.s32.totalorder %s19, 1
      %p65 = por %p63, %p64
      %p67 = scmp.ne.s32.totalorder %s50, %s66
      %p68 = scmp.eq.s32.totalorder %s19, 0
      %p69 = por %p67, %p68
      %s70 = ssub.s32 %s20, %s39
      %s71 = ssub.s32 %s21, %s35
      %s72 = sor.u32 %s70, %s71
      %s73 = ssub.s32 %s22, %s31
      %s74 = sor.u32 %s72, %s73
      %p75 = scmp.eq.s32.totalorder %s74, 0
      %s77 = sadd.s32 %s76, 1
      %s78 = scalar_select %p75, %s76, %s77
      %p81 = pneg %p75
      %p82 = scmp.eq.s32.totalorder %s13, 1
      %p83 = por %p81, %p82
      %p84 = scmp.ne.s32.totalorder %s76, %s79
      %p85 = scmp.eq.s32.totalorder %s13, 0
      %p86 = por %p84, %p85
      %p87 = scmp.ne.s32.totalorder %s76, %s79
      %p88 = scmp.eq.s32.totalorder %s18, 1
      %p89 = por %p87, %p88
      %p90 = scmp.ne.s32.totalorder %s79, %s80
      %p91 = scmp.eq.s32.totalorder %s18, 0
      %p92 = por %p90, %p91
      %p93 = scmp.ne.s32.totalorder %s79, %s80
      %p94 = scmp.eq.s32.totalorder %s19, 1
      %p95 = por %p93, %p94
      %p97 = scmp.ne.s32.totalorder %s80, %s96
      %p98 = scmp.eq.s32.totalorder %s19, 0
      %p99 = por %p97, %p98
      %p100 = scmp.le.s32.totalorder 1, %s13
      %p101 = scmp.lt.s32.totalorder %s13, 3
      %p102 = pnand %p100, %p101
      %p103 = pneg %p102
      // Predicated region
      $region9: #{tpu_custom_call.1} parent=5 // pred_check
        _
      $region10: #{tpu_custom_call.1} parent=5 // pred_check_branch
        %105 = sbr.rel (%p102) target = $region12
      $region11: #{tpu_custom_call.1} parent=5 // pred_region
        %s106 = ssub.s32 %s13, 1
      $region12: #{tpu_custom_call.1} parent=5 // pred_fallthru
        _
      %p107 = scmp.lt.s32.totalorder %s13, 2
      // Predicated region
      $region13: #{tpu_custom_call.1} parent=5 // pred_check
        %p108 = pneg %p107
      $region14: #{tpu_custom_call.1} parent=5 // pred_check_branch
        %110 = sbr.rel (%p108) target = $region16
      $region15: #{tpu_custom_call.1} parent=5 // pred_region
        // Predicated region
        $region17: #{tpu_custom_call.1} parent=15 // pred_check
          %p111 = pneg %p56
        $region18: #{tpu_custom_call.1} parent=15 // pred_check_branch
          %113 = sbr.rel (%p111) target = $region20
        $region19: #{tpu_custom_call.1} parent=15 // pred_region
          %s114 = sand.u32 %s46, 1
          %s115 = scalar_lea.sflag [#allocation3], %s114
          %s116 = sand.u32 %s46, 1
          %s117 = smul.addr %s116, 8
          %s118 = scalar_lea.vmem [#allocation2], %s117
          %s120 = ssub.s32 128, 128
          %121 = vsyncadd %s115, %s120
          %s122 = sadd.s32 %s22, %s21
          %s123 = sadd.s32 %s122, %s20
          %s124 = smul.addr %s123, 128
          %s125 = scalar_lea.hbm %s0, %s124
          %s127 = sshll.u32 %s118, 4
          %s128 = int_to_ptr.vmem [resolvable:$true] %s127
          %130 = dma.hbm_to_vmem [thread:$0]  %s125, 128, %s128, %s115
        $region20: #{tpu_custom_call.1} parent=15 // pred_fallthru
          _
      $region16: #{tpu_custom_call.1} parent=5 // pred_fallthru
        _
      %p131 = scmp.le.s32.totalorder 1, %s13
      %p132 = scmp.lt.s32.totalorder %s13, 3
      %p133 = pnand %p131, %p132
      %p134 = pneg %p133
      // Predicated region
      $region21: #{tpu_custom_call.1} parent=5 // pred_check
        _
      $region22: #{tpu_custom_call.1} parent=5 // pred_check_branch
        %136 = sbr.rel (%p133) target = $region24
      $region23: #{tpu_custom_call.1} parent=5 // pred_region
        %s137 = ssub.s32 %s13, 1
        %s138 = sand.u32 %s49, 1
        %s139 = scalar_lea.sflag [#allocation3], %s138
        %s140 = sand.u32 %s49, 1
        %s141 = smul.addr %s140, 8
        %s142 = scalar_lea.vmem [#allocation2], %s141
        // Predicated region
        $region25: #{tpu_custom_call.1} parent=23 // pred_check
          %p143 = pneg %p62
        $region26: #{tpu_custom_call.1} parent=23 // pred_check_branch
          %145 = sbr.rel (%p143) target = $region28
        $region27: #{tpu_custom_call.1} parent=23 // pred_region
          %146 = dma.done %s139, 128
        $region28: #{tpu_custom_call.1} parent=23 // pred_fallthru
          _
        %s147 = sand.u32 %s49, 1
        %s148 = scalar_lea.sflag [#allocation3], %s147
        %s149 = sand.u32 %s49, 1
        %s150 = smul.addr %s149, 8
        %s151 = scalar_lea.vmem [#allocation2], %s150
        %p152 = pneg %p62
        %p153 = pneg %p59
        %p154 = pneg %p92
        %p155 = pneg %p89
        %s156 = sand.u32 %s79, 1
        %s157 = scalar_lea.sflag [#allocation4], %s156
        %s158 = sand.u32 %s79, 1
        %s159 = smul.addr %s158, 8
        %s160 = scalar_lea.vmem [#allocation5], %s159
        %v161 = vld [vmem:[%s142] sm:$0xff]
        %v163 = vrot.slane %v161, 1
        %v165 = vadd.f32 %v163, 0.0
        %v166 = vadd.f32 %v161, %v163
        %vm168 = vcmask 1045504
        %v169 = vrot.slane %v161, 2
        %v170 = vrot.slane 0.0, 2
        %v171 = vsel %vm168, %v169, %v170
        %v174 = vadd.f32 %v165, %v169
        %v175 = vadd.f32 %v166, %v171
        %v176 = vmul.f32 %v174, 0.33333334
        %v177 = vmul.f32 %v175, 0.33333334
        %vm178 = vcmask 261127
        %179 = vst.msk [vmem:[%s160 - $0x7] sm:$0x80] %vm178, %v176
        %vm180 = vcmask 260096
        %181 = vst.msk [vmem:[%s160 + $0x1] sm:$0x7f] %vm180, %v177
        %s182 = sand.u32 %s79, 1
        %s183 = scalar_lea.sflag [#allocation4], %s182
        %s184 = sand.u32 %s79, 1
        %s185 = smul.addr %s184, 8
        %s186 = scalar_lea.vmem [#allocation5], %s185
        // Predicated region
        $region29: #{tpu_custom_call.1} parent=23 // pred_check
          %p187 = pneg %p89
        $region30: #{tpu_custom_call.1} parent=23 // pred_check_branch
          %189 = sbr.rel (%p187) target = $region32
        $region31: #{tpu_custom_call.1} parent=23 // pred_region
          %s191 = ssub.s32 128, 128
          %192 = vsyncadd %s183, %s191
          %s193 = sadd.s32 %s25, %s24
          %s194 = sadd.s32 %s193, %s23
          %s195 = smul.addr %s194, 128
          %s196 = scalar_lea.hbm %s1, %s195
          %s198 = sshll.u32 %s186, 4
          %s199 = int_to_ptr.vmem [resolvable:$true] %s198
          %201 = dma.vmem_to_hbm [thread:$0]  %s199, 128, %s196, %s183
        $region32: #{tpu_custom_call.1} parent=23 // pred_fallthru
          _
      $region24: #{tpu_custom_call.1} parent=5 // pred_fallthru
        _
      %p202 = scmp.le.s32.totalorder 2, %s13
      // Predicated region
      $region33: #{tpu_custom_call.1} parent=5 // pred_check
        %p203 = pneg %p202
      $region34: #{tpu_custom_call.1} parent=5 // pred_check_branch
        %205 = sbr.rel (%p203) target = $region36
      $region35: #{tpu_custom_call.1} parent=5 // pred_region
        %s206 = ssub.s32 %s13, 2
        // Predicated region
        $region37: #{tpu_custom_call.1} parent=35 // pred_check
          %p207 = pneg %p95
        $region38: #{tpu_custom_call.1} parent=35 // pred_check_branch
          %209 = sbr.rel (%p207) target = $region40
        $region39: #{tpu_custom_call.1} parent=35 // pred_region
          %s210 = sand.u32 %s80, 1
          %s211 = scalar_lea.sflag [#allocation4], %s210
          %s212 = sand.u32 %s80, 1
          %s213 = smul.addr %s212, 8
          %s214 = scalar_lea.vmem [#allocation5], %s213
          %215 = dma.done %s211, 128
        $region40: #{tpu_custom_call.1} parent=35 // pred_fallthru
          _
      $region36: #{tpu_custom_call.1} parent=5 // pred_fallthru
        _
    $region6: #{tpu_custom_call.1} parent=1 // loop_footer
      %s17 = sadd.s32 1, %s13
    $region7: #{tpu_custom_call.1} parent=1 // loop_footer_branch
      %12 = sbr.rel target = $region3
    $region8: #{tpu_custom_call.1} parent=1 // loop_exit
      _
    %216 = vsyncpa [#allocation3], 1
    %s217 = scalar_lea.sflag [#allocation3], 1
    %218 = vsyncpa %s217, 1
    %219 = vsyncpa [#allocation4], 1
    %s220 = scalar_lea.sflag [#allocation4], 1
    %221 = vsyncpa %s220, 1

</llo_original>
